<compile_context>
chip_gen: v5e
topology: v5e:2x2
jax: 0.10.0
libtpu: 0.0.40
codegen_flags: <defaults>
</compile_context>

<pallas_src>
import functools

import jax
import jax.numpy as jnp
from jax.experimental import pallas as pl
from jax.experimental.pallas import tpu as pltpu

LANE = 128
VMEM_LIMIT_BYTES = 56 * 1024 * 1024      # safe on v7x (64 MiB physical per TC)
SMALL_N_THRESHOLD = 2048                 # n_pad at/below this -> single fused kernel
RESIDENT_FEAT_BYTES = 24 * 1024 * 1024   # budget for keeping X / H1 resident in VMEM


def _round_up(x, m):
    return ((x + m - 1) // m) * m


def _pad2d(x, rows, cols, dtype):
    r, c = x.shape
    return jnp.pad(x, ((0, rows - r), (0, cols - c))).astype(dtype)


def prepare_adjacency(a_norm):
    """Pad A_hat to a lane-dense multiple of 128 and cast to bf16 ONCE.

    Hoisted out of gcn_forward so repeated forward passes don't re-pay the
    O(N^2) pad + cast pass over the adjacency matrix."""
    n = a_norm.shape[0]
    n_pad = _round_up(n, LANE)
    return _pad2d(a_norm, n_pad, n_pad, jnp.bfloat16)


# ---------------------------------------------------------------------------
# Small-N fast path: whole two-layer GCN in one un-gridded, VMEM-resident call.
# ---------------------------------------------------------------------------
def _gcn_small_kernel(a_ref, x_ref, w1_ref, b1_ref, w2_ref, b2_ref, out_ref):
    # Layer 1: H1 = relu(A_hat @ (X @ W1) + b1)    (bf16 MXU, f32 accumulate)
    xw1 = jnp.dot(x_ref[...], w1_ref[...], preferred_element_type=jnp.float32)
    h1 = jnp.dot(a_ref[...], xw1.astype(jnp.bfloat16),
                 preferred_element_type=jnp.float32) + b1_ref[...]
    h1 = jnp.maximum(h1, 0.0)
    # Layer 2: OUT = A_hat @ (H1 @ W2) + b2
    hw2 = jnp.dot(h1.astype(jnp.bfloat16), w2_ref[...],
                  preferred_element_type=jnp.float32)
    out = jnp.dot(a_ref[...], hw2.astype(jnp.bfloat16),
                  preferred_element_type=jnp.float32) + b2_ref[...]
    out_ref[...] = out.astype(out_ref.dtype)


def _gcn_small(a_p, x_p, w1_p, b1_p, w2_p, b2_p):
    n_pad = a_p.shape[0]
    c_pad = w2_p.shape[1]
    vmem_spec = pl.BlockSpec(memory_space=pltpu.MemorySpace.VMEM)
    return pl.pallas_call(
        _gcn_small_kernel,
        out_shape=jax.ShapeDtypeStruct((n_pad, c_pad), jnp.float32),
        in_specs=[vmem_spec] * 6,
        out_specs=vmem_spec,
        compiler_params=pltpu.CompilerParams(vmem_limit_bytes=VMEM_LIMIT_BYTES),
    )(a_p, x_p, w1_p, b1_p, w2_p, b2_p)


# ---------------------------------------------------------------------------
# Tiled path: one fused GraphConv layer  OUT = [relu](A_hat @ (X @ W) + b)
#   grid = (row tiles "parallel", A_hat-column reduction "arbitrary", last)
# ---------------------------------------------------------------------------
def _fused_layer_kernel(a_ref, x_ref, w_ref, b_ref, out_ref, acc_ref, *,
                        tk, apply_relu, x_resident):
    k = pl.program_id(1)

    @pl.when(k == 0)
    def _():
        acc_ref[...] = jnp.zeros_like(acc_ref)

    # On-the-fly feature transform for this k-slab (W resident in VMEM). The
    # extra matmul is free in this HBM-bound kernel (MXU slot has slack).
    if x_resident:
        k_off = pl.multiple_of(k * tk, tk)
        x_k = x_ref[pl.ds(k_off, tk), :]
    else:
        x_k = x_ref[...]
    xw_k = jnp.dot(x_k, w_ref[...],
                   preferred_element_type=jnp.float32).astype(jnp.bfloat16)
    acc_ref[...] += jnp.dot(a_ref[...], xw_k, preferred_element_type=jnp.float32)

    @pl.when(k == pl.num_programs(1) - 1)
    def _():
        res = acc_ref[...] + b_ref[...]            # f32 bias add
        if apply_relu:
            res = jnp.maximum(res, 0.0)            # f32 ReLU
        out_ref[...] = res.astype(out_ref.dtype)


def fused_graph_conv(a_p, x_p, w_p, b_p, *, tm, tk, apply_relu, out_dtype):
    n_pad = a_p.shape[0]
    f_in = x_p.shape[1]
    f_out = w_p.shape[1]

    # Keep the per-layer feature matrix resident in VMEM when it fits (DMA'd once,
    # no per-row-tile re-reads); otherwise fall back to streaming (tk, f_in) slabs.
    x_resident = 2 * n_pad * f_in * x_p.dtype.itemsize <= RESIDENT_FEAT_BYTES
    if x_resident:
        x_spec = pl.BlockSpec((n_pad, f_in), lambda i, k: (0, 0))
    else:
        x_spec = pl.BlockSpec((tk, f_in), lambda i, k: (k, 0))

    kernel = functools.partial(_fused_layer_kernel, tk=tk,
                               apply_relu=apply_relu, x_resident=x_resident)
    return pl.pallas_call(
        kernel,
        out_shape=jax.ShapeDtypeStruct((n_pad, f_out), out_dtype),
        grid_spec=pltpu.PrefetchScalarGridSpec(
            num_scalar_prefetch=0,
            grid=(n_pad // tm, n_pad // tk),          # reduction axis last
            in_specs=[
                # A_hat tile stream (dominant HBM traffic), triple-buffered.
                pl.BlockSpec((tm, tk), lambda i, k: (i, k),
                             pipeline_mode=pl.Buffered(3)),
                x_spec,                                            # X / H1
                pl.BlockSpec((f_in, f_out), lambda i, k: (0, 0)),  # W resident
                pl.BlockSpec((1, f_out), lambda i, k: (0, 0)),     # bias resident
            ],
            out_specs=pl.BlockSpec((tm, f_out), lambda i, k: (i, 0)),
            scratch_shapes=[pltpu.VMEM((tm, f_out), jnp.float32)],
        ),
        compiler_params=pltpu.CompilerParams(
            dimension_semantics=("parallel", "arbitrary"),
            vmem_limit_bytes=VMEM_LIMIT_BYTES),
    )(a_p, x_p, w_p, b_p)


def _pick_tiles(n_pad):
    tm = LANE
    for cand in (1024, 512, 256, 128):
        # Keep >= 2 row tiles so both v7x TensorCores get work.
        if n_pad % cand == 0 and n_pad // cand >= 2:
            tm = cand
            break
    tk = LANE
    for cand in (1024, 512, 256, 128):
        if n_pad % cand == 0:
            tk = cand
            break
    return tm, tk


# ---------------------------------------------------------------------------
# Full forward wrapper
# ---------------------------------------------------------------------------
@functools.partial(jax.jit, static_argnames=("small_n_threshold",))
def gcn_forward(a_p, x, w1, b1, w2, b2, *, small_n_threshold=SMALL_N_THRESHOLD):
    """a_p: prepare_adjacency(A_hat) (padded, bf16). x/w/b: unpadded f32 arrays."""
    n, in_feats = x.shape
    h_feats = w1.shape[1]
    num_classes = w2.shape[1]
    n_pad = a_p.shape[0]

    fin_pad = _round_up(in_feats, LANE)
    h_pad = _round_up(h_feats, LANE)
    c_pad = _round_up(num_classes, LANE)

    # Lane-dense, bf16 MXU operands (f32 accumulation happens in-kernel).
    x_p = _pad2d(x, n_pad, fin_pad, jnp.bfloat16)
    w1_p = _pad2d(w1, fin_pad, h_pad, jnp.bfloat16)
    w2_p = _pad2d(w2, h_pad, c_pad, jnp.bfloat16)
    b1_p = _pad2d(b1.reshape(1, -1), 1, h_pad, jnp.float32)
    b2_p = _pad2d(b2.reshape(1, -1), 1, c_pad, jnp.float32)

    if n_pad <= small_n_threshold:
        out_p = _gcn_small(a_p, x_p, w1_p, b1_p, w2_p, b2_p)
    else:
        tm, tk = _pick_tiles(n_pad)
        # Layer 1: H1 = relu(A_hat @ (X @ W1) + b1)   (fused transform+aggregate)
        h1 = fused_graph_conv(a_p, x_p, w1_p, b1_p, tm=tm, tk=tk,
                              apply_relu=True, out_dtype=jnp.bfloat16)
        # Layer 2: OUT = A_hat @ (H1 @ W2) + b2
        out_p = fused_graph_conv(a_p, h1, w2_p, b2_p, tm=tm, tk=tk,
                                 apply_relu=False, out_dtype=jnp.float32)
    # TODO(synk): fp8 (v7x) / int8 (v5e/v6e) A_hat compression would roughly halve
    # the dominant HBM stream but needs a dedicated accuracy check, so not done here.
    return out_p[:n, :num_classes]


# ---------------------------------------------------------------------------
# Test helpers
# ---------------------------------------------------------------------------
def build_normalized_adjacency(key, n, p=0.3):
    """Deterministic random undirected graph -> D^{-1/2} A D^{-1/2} (dense)."""
    a = jax.random.bernoulli(key, p=p, shape=(n, n)).astype(jnp.float32)
    a = jnp.triu(a, k=1)
    a = a + a.T  # symmetric, no self-loops (DGL GraphConv default)
    deg = a.sum(axis=1)
    d_inv_sqrt = jnp.where(deg > 0, 1.0 / jnp.sqrt(jnp.maximum(deg, 1e-12)), 0.0)
    return a * d_inv_sqrt[:, None] * d_inv_sqrt[None, :]


def glorot(key, shape):
    fan_in, fan_out = shape
    limit = (6.0 / (fan_in + fan_out)) ** 0.5
    return jax.random.uniform(key, shape, jnp.float32, -limit, limit)


def ref_forward_f32(a, x, w1, b1, w2, b2):
    h = jnp.maximum(a @ (x @ w1) + b1[None, :], 0.0)
    return a @ (h @ w2) + b2[None, :]


def ref_forward_bf16(a, x, w1, b1, w2, b2):
    """Pure-JAX reference emulating the kernel's bf16 MXU inputs / f32 accumulate."""
    bf = lambda t: t.astype(jnp.bfloat16).astype(jnp.float32)
    xw1 = bf(x) @ bf(w1)
    h = jnp.maximum(bf(a) @ bf(xw1) + b1[None, :], 0.0)
    hw2 = bf(h) @ bf(w2)
    return bf(a) @ bf(hw2) + b2[None, :]


if __name__ == "__main__":
    key = jax.random.PRNGKey(0)
    k_adj, k_x, k_w1, k_b1, k_w2, k_b2, k_adj2, k_x2 = jax.random.split(key, 8)

    # ---- Small shapes consistent with the module (uses the single-kernel path) ----
    N, IN_FEATS, H_FEATS, NUM_CLASSES = 16, 8, 32, 4
    a_norm = build_normalized_adjacency(k_adj, N)                # [N, N]
    x = jax.random.normal(k_x, (N, IN_FEATS), jnp.float32)       # [N, in_feats]
    w1 = glorot(k_w1, (IN_FEATS, H_FEATS))
    b1 = 0.1 * jax.random.normal(k_b1, (H_FEATS,), jnp.float32)
    w2 = glorot(k_w2, (H_FEATS, NUM_CLASSES))
    b2 = 0.1 * jax.random.normal(k_b2, (NUM_CLASSES,), jnp.float32)

    a_p = prepare_adjacency(a_norm)          # pad + bf16 cast, hoisted & done once
    out = jax.block_until_ready(gcn_forward(a_p, x, w1, b1, w2, b2))
    assert out.shape == (N, NUM_CLASSES)

    ref_bf = ref_forward_bf16(a_norm, x, w1, b1, w2, b2)
    ref_32 = ref_forward_f32(a_norm, x, w1, b1, w2, b2)
    assert jnp.allclose(out, ref_bf, atol=2.5e-2, rtol=2.5e-2), (
        float(jnp.max(jnp.abs(out - ref_bf))))
    assert jnp.allclose(out, ref_32, atol=5e-2, rtol=5e-2), (
        float(jnp.max(jnp.abs(out - ref_32))))

    # ---- Larger graph forcing the tiled fused-GraphConv path (grid (3, 3)) ----
    N2 = 1500
    a_norm2 = build_normalized_adjacency(k_adj2, N2, p=0.05)
    x2 = jax.random.normal(k_x2, (N2, IN_FEATS), jnp.float32)
    a_p2 = prepare_adjacency(a_norm2)
    out2 = jax.block_until_ready(
        gcn_forward(a_p2, x2, w1, b1, w2, b2, small_n_threshold=0))
    assert out2.shape == (N2, NUM_CLASSES)
    ref_bf2 = ref_forward_bf16(a_norm2, x2, w1, b1, w2, b2)
    assert jnp.allclose(out2, ref_bf2, atol=2.5e-2, rtol=2.5e-2), (
        float(jnp.max(jnp.abs(out2 - ref_bf2))))

    print("KERNEL_OK")
</pallas_src>

<mosaic_0001>
module attributes {stable_mosaic.version = 11 : i64} {
  func.func @_gcn_small_kernel(%arg0: memref<128x128xbf16, #tpu.memory_space<vmem>>, %arg1: memref<128x128xbf16, #tpu.memory_space<vmem>>, %arg2: memref<128x128xbf16, #tpu.memory_space<vmem>>, %arg3: memref<1x128xf32, #tpu.memory_space<vmem>>, %arg4: memref<128x128xbf16, #tpu.memory_space<vmem>>, %arg5: memref<1x128xf32, #tpu.memory_space<vmem>>, %arg6: memref<128x128xf32, #tpu.memory_space<vmem>>) attributes {dimension_semantics = [], scalar_prefetch = 0 : i64, scratch_operands = 0 : i64, tpu.core_type = #tpu.core_type<tc>} {
    %c0 = arith.constant 0 : index
    %c0_0 = arith.constant 0 : index
    %0 = vector.load %arg1[%c0, %c0_0] : memref<128x128xbf16, #tpu.memory_space<vmem>>, vector<128x128xbf16>
    %c0_1 = arith.constant 0 : index
    %c0_2 = arith.constant 0 : index
    %1 = vector.load %arg2[%c0_1, %c0_2] : memref<128x128xbf16, #tpu.memory_space<vmem>>, vector<128x128xbf16>
    %cst = arith.constant dense<0.000000e+00> : vector<128x128xf32>
    %2 = tpu.matmul %0, %1, %cst {dimension_numbers = #tpu.dot_dimension_numbers<[1], [0], [0], [1], [0, 0, 1, 1], [], []>} : vector<128x128xbf16>, vector<128x128xbf16>, vector<128x128xf32> -> vector<128x128xf32>
    %c0_3 = arith.constant 0 : index
    %c0_4 = arith.constant 0 : index
    %3 = vector.load %arg0[%c0_3, %c0_4] : memref<128x128xbf16, #tpu.memory_space<vmem>>, vector<128x128xbf16>
    %4 = arith.truncf %2 : vector<128x128xf32> to vector<128x128xbf16>
    %cst_5 = arith.constant dense<0.000000e+00> : vector<128x128xf32>
    %5 = tpu.matmul %3, %4, %cst_5 {dimension_numbers = #tpu.dot_dimension_numbers<[1], [0], [0], [1], [0, 0, 1, 1], [], []>} : vector<128x128xbf16>, vector<128x128xbf16>, vector<128x128xf32> -> vector<128x128xf32>
    %c0_6 = arith.constant 0 : index
    %c0_7 = arith.constant 0 : index
    %6 = vector.load %arg3[%c0_6, %c0_7] : memref<1x128xf32, #tpu.memory_space<vmem>>, vector<1x128xf32>
    %7 = vector.broadcast %6 : vector<1x128xf32> to vector<128x128xf32>
    %8 = arith.addf %5, %7 : vector<128x128xf32>
    %cst_8 = arith.constant 0.000000e+00 : f32
    %9 = vector.broadcast %cst_8 : f32 to vector<128x128xf32>
    %10 = arith.maximumf %8, %9 : vector<128x128xf32>
    %11 = arith.truncf %10 : vector<128x128xf32> to vector<128x128xbf16>
    %c0_9 = arith.constant 0 : index
    %c0_10 = arith.constant 0 : index
    %12 = vector.load %arg4[%c0_9, %c0_10] : memref<128x128xbf16, #tpu.memory_space<vmem>>, vector<128x128xbf16>
    %cst_11 = arith.constant dense<0.000000e+00> : vector<128x128xf32>
    %13 = tpu.matmul %11, %12, %cst_11 {dimension_numbers = #tpu.dot_dimension_numbers<[1], [0], [0], [1], [0, 0, 1, 1], [], []>} : vector<128x128xbf16>, vector<128x128xbf16>, vector<128x128xf32> -> vector<128x128xf32>
    %c0_12 = arith.constant 0 : index
    %c0_13 = arith.constant 0 : index
    %14 = vector.load %arg0[%c0_12, %c0_13] : memref<128x128xbf16, #tpu.memory_space<vmem>>, vector<128x128xbf16>
    %15 = arith.truncf %13 : vector<128x128xf32> to vector<128x128xbf16>
    %cst_14 = arith.constant dense<0.000000e+00> : vector<128x128xf32>
    %16 = tpu.matmul %14, %15, %cst_14 {dimension_numbers = #tpu.dot_dimension_numbers<[1], [0], [0], [1], [0, 0, 1, 1], [], []>} : vector<128x128xbf16>, vector<128x128xbf16>, vector<128x128xf32> -> vector<128x128xf32>
    %c0_15 = arith.constant 0 : index
    %c0_16 = arith.constant 0 : index
    %17 = vector.load %arg5[%c0_15, %c0_16] : memref<1x128xf32, #tpu.memory_space<vmem>>, vector<1x128xf32>
    %18 = vector.broadcast %17 : vector<1x128xf32> to vector<128x128xf32>
    %19 = arith.addf %16, %18 : vector<128x128xf32>
    %c0_17 = arith.constant 0 : index
    %c0_18 = arith.constant 0 : index
    %20 = vector.load %arg6[%c0_17, %c0_18] : memref<128x128xf32, #tpu.memory_space<vmem>>, vector<128x128xf32>
    tpu.vector_store %arg6[%c0_17, %c0_18], %19 {strides = array<i32>} : memref<128x128xf32, #tpu.memory_space<vmem>>, vector<128x128xf32>,
    return
  }
}

</mosaic_0001>

<llo_original>
// kernel: gcn_forward.1
$region0: #{gcn_forward.1}
  #allocation0 [shape = 'u32[]', space=smem, size = 0x4, offset = 0x4, fixed_abs, tag = 'smem constant byte address 0x4 - core index']
  #allocation1 [shape = 'u32[72,128]{1,0:T(1,128)}', space=vmem, size = 0x9000, scoped, tag = 'internal scratch']
  %s0 = inlined_call_operand.vmem [shape: bf16[128,128], index: 0, kind: input, shape index: {}]
  %s1 = inlined_call_operand.vmem [shape: bf16[128,128], index: 1, kind: input, shape index: {}]
  %s2 = inlined_call_operand.vmem [shape: bf16[128,128], index: 2, kind: input, shape index: {}]
  %s3 = inlined_call_operand.vmem [shape: f32[1,128], index: 3, kind: input, shape index: {}]
  %s4 = inlined_call_operand.vmem [shape: bf16[128,128], index: 4, kind: input, shape index: {}]
  %s5 = inlined_call_operand.vmem [shape: f32[1,128], index: 5, kind: input, shape index: {}]
  %s6 = inlined_call_operand.vmem [shape: f32[128,128], index: 6, kind: output, shape index: {}]
  %s7 = sld [smem:[#allocation0]]
  $region34: #{gcn_forward.1} parent=0
    _
  %s9 = ssub.s32 1, %s7
  %s10 = scalar_select 0, %s9, %s7
  // Predicated region
  $region2: #{gcn_forward.1} parent=0 // pred_check
    _
  $region3: #{gcn_forward.1} parent=0 // pred_check_branch
    %12 = sbr.rel (0) target = $region5
  $region4: #{gcn_forward.1} parent=0 // pred_region
    _
  $region5: #{gcn_forward.1} parent=0 // pred_fallthru
    _
  // Predicated region
  $region6: #{gcn_forward.1} parent=0 // pred_check
    _
  $region7: #{gcn_forward.1} parent=0 // pred_check_branch
    %14 = sbr.rel (0) target = $region9
  $region8: #{gcn_forward.1} parent=0 // pred_region
    _
  $region9: #{gcn_forward.1} parent=0 // pred_fallthru
    _
  // Predicated region
  $region10: #{gcn_forward.1} parent=0 // pred_check
    _
  $region11: #{gcn_forward.1} parent=0 // pred_check_branch
    %16 = sbr.rel (0) target = $region13
  $region12: #{gcn_forward.1} parent=0 // pred_region
    _
  $region13: #{gcn_forward.1} parent=0 // pred_fallthru
    _
  // Predicated region
  $region14: #{gcn_forward.1} parent=0 // pred_check
    _
  $region15: #{gcn_forward.1} parent=0 // pred_check_branch
    %18 = sbr.rel (0) target = $region17
  $region16: #{gcn_forward.1} parent=0 // pred_region
    _
  $region17: #{gcn_forward.1} parent=0 // pred_fallthru
    _
  // Predicated region
  $region18: #{gcn_forward.1} parent=0 // pred_check
    _
  $region19: #{gcn_forward.1} parent=0 // pred_check_branch
    %20 = sbr.rel (0) target = $region21
  $region20: #{gcn_forward.1} parent=0 // pred_region
    _
  $region21: #{gcn_forward.1} parent=0 // pred_fallthru
    _
  // Predicated region
  $region22: #{gcn_forward.1} parent=0 // pred_check
    _
  $region23: #{gcn_forward.1} parent=0 // pred_check_branch
    %22 = sbr.rel (0) target = $region25
  $region24: #{gcn_forward.1} parent=0 // pred_region
    _
  $region25: #{gcn_forward.1} parent=0 // pred_fallthru
    _
  %v23 = vld [vmem:[%s1] sm:$0xf]
  %v24 = vld [vmem:[%s1 + $0x4] sm:$0xf]
  %v25 = vld [vmem:[%s1 + $0x8] sm:$0xf]
  %v26 = vld [vmem:[%s1 + $0xc] sm:$0xf]
  %v27 = vld [vmem:[%s1 + $0x10] sm:$0xf]
  %v28 = vld [vmem:[%s1 + $0x14] sm:$0xf]
  %v29 = vld [vmem:[%s1 + $0x18] sm:$0xf]
  %v30 = vld [vmem:[%s1 + $0x1c] sm:$0xf]
  %v31 = vld [vmem:[%s1 + $0x20] sm:$0xf]
  %v32 = vld [vmem:[%s1 + $0x24] sm:$0xf]
  %v33 = vld [vmem:[%s1 + $0x28] sm:$0xf]
  %v34 = vld [vmem:[%s1 + $0x2c] sm:$0xf]
  %v35 = vld [vmem:[%s1 + $0x30] sm:$0xf]
  %v36 = vld [vmem:[%s1 + $0x34] sm:$0xf]
  %v37 = vld [vmem:[%s1 + $0x38] sm:$0xf]
  %v38 = vld [vmem:[%s1 + $0x3c] sm:$0xf]
  %v39 = vld [vmem:[%s2] sm:$0xf]
  %v40 = vld [vmem:[%s2 + $0x4] sm:$0xf]
  %v41 = vld [vmem:[%s2 + $0x8] sm:$0xf]
  %v42 = vld [vmem:[%s2 + $0xc] sm:$0xf]
  %v43 = vld [vmem:[%s2 + $0x10] sm:$0xf]
  %v44 = vld [vmem:[%s2 + $0x14] sm:$0xf]
  %v45 = vld [vmem:[%s2 + $0x18] sm:$0xf]
  %v46 = vld [vmem:[%s2 + $0x1c] sm:$0xf]
  %v47 = vld [vmem:[%s2 + $0x20] sm:$0xf]
  %v48 = vld [vmem:[%s2 + $0x24] sm:$0xf]
  %v49 = vld [vmem:[%s2 + $0x28] sm:$0xf]
  %v50 = vld [vmem:[%s2 + $0x2c] sm:$0xf]
  %v51 = vld [vmem:[%s2 + $0x30] sm:$0xf]
  %v52 = vld [vmem:[%s2 + $0x34] sm:$0xf]
  %v53 = vld [vmem:[%s2 + $0x38] sm:$0xf]
  %v54 = vld [vmem:[%s2 + $0x3c] sm:$0xf]
  %v71 = vunpack.c.l.b16 %v23
  %v72 = vunpack.c.l.b16 %v24
  %v73 = vunpack.c.l.b16 %v25
  %v74 = vunpack.c.l.b16 %v26
  %v75 = vunpack.c.l.b16 %v27
  %v76 = vunpack.c.l.b16 %v28
  %v77 = vunpack.c.l.b16 %v29
  %v78 = vunpack.c.l.b16 %v30
  %v79 = vunpack.c.l.b16 %v31
  %v80 = vunpack.c.l.b16 %v32
  %v81 = vunpack.c.l.b16 %v33
  %v82 = vunpack.c.l.b16 %v34
  %v83 = vunpack.c.l.b16 %v35
  %v84 = vunpack.c.l.b16 %v36
  %v85 = vunpack.c.l.b16 %v37
  %v86 = vunpack.c.l.b16 %v38
  %v87 = vpack.c.b16 %v72, %v71
  %v88 = vpack.c.b16 %v74, %v73
  %v89 = vpack.c.b16 %v76, %v75
  %v90 = vpack.c.b16 %v78, %v77
  %v91 = vpack.c.b16 %v80, %v79
  %v92 = vpack.c.b16 %v82, %v81
  %v93 = vpack.c.b16 %v84, %v83
  %v94 = vpack.c.b16 %v86, %v85
  %v119 = vunpack.c.l.b16 %v39
  %v120 = vunpack.c.l.b16 %v40
  %v121 = vunpack.c.l.b16 %v41
  %v122 = vunpack.c.l.b16 %v42
  %v123 = vunpack.c.l.b16 %v43
  %v124 = vunpack.c.l.b16 %v44
  %v125 = vunpack.c.l.b16 %v45
  %v126 = vunpack.c.l.b16 %v46
  %v127 = vunpack.c.l.b16 %v47
  %v128 = vunpack.c.l.b16 %v48
  %v129 = vunpack.c.l.b16 %v49
  %v130 = vunpack.c.l.b16 %v50
  %v131 = vunpack.c.l.b16 %v51
  %v132 = vunpack.c.l.b16 %v52
  %v133 = vunpack.c.l.b16 %v53
  %v134 = vunpack.c.l.b16 %v54
  %v135 = vpack.c.b16 %v120, %v119
  %v136 = vpack.c.b16 %v122, %v121
  %v137 = vpack.c.b16 %v124, %v123
  %v138 = vpack.c.b16 %v126, %v125
  %v139 = vpack.c.b16 %v128, %v127
  %v140 = vpack.c.b16 %v130, %v129
  %v141 = vpack.c.b16 %v132, %v131
  %v142 = vpack.c.b16 %v134, %v133
  %151 = vmatpush.bf16.msra.mxu0 %v142
  %152 = vmatpush.bf16.msra.mxu0 %v141
  %153 = vmatpush.bf16.msra.mxu0 %v140
  %154 = vmatpush.bf16.msra.mxu0 %v139
  %155 = vmatpush.bf16.msra.mxu0 %v138
  %156 = vmatpush.bf16.msra.mxu0 %v137
  %157 = vmatpush.bf16.msra.mxu0 %v136
  %158 = vmatpush.bf16.msra.mxu0 %v135
  %159 = vmatmul.bf16.gmra.mxu0 %v87
  %v160 = vpop.f32.mrf.mxu0
  %v161 = vadd.f32 0.0, %v160
  %v162 = vpop.f32.mrf.mxu0
  %v163 = vadd.f32 0.0, %v162
  %164 = vmatmul.bf16.gmra.mxu0 %v88
  %v165 = vpop.f32.mrf.mxu0
  %v166 = vadd.f32 0.0, %v165
  %v167 = vpop.f32.mrf.mxu0
  %v168 = vadd.f32 0.0, %v167
  %169 = vmatmul.bf16.gmra.mxu0 %v89
  %v170 = vpop.f32.mrf.mxu0
  %v171 = vadd.f32 0.0, %v170
  %v172 = vpop.f32.mrf.mxu0
  %v173 = vadd.f32 0.0, %v172
  %174 = vmatmul.bf16.gmra.mxu0 %v90
  %v175 = vpop.f32.mrf.mxu0
  %v176 = vadd.f32 0.0, %v175
  %v177 = vpop.f32.mrf.mxu0
  %v178 = vadd.f32 0.0, %v177
  %179 = vmatmul.bf16.gmra.mxu0 %v91
  %v180 = vpop.f32.mrf.mxu0
  %v181 = vadd.f32 0.0, %v180
  %v182 = vpop.f32.mrf.mxu0
  %v183 = vadd.f32 0.0, %v182
  %184 = vmatmul.bf16.gmra.mxu0 %v92
  %v185 = vpop.f32.mrf.mxu0
  %v186 = vadd.f32 0.0, %v185
  %v187 = vpop.f32.mrf.mxu0
  %v188 = vadd.f32 0.0, %v187
  %189 = vmatmul.bf16.gmra.mxu0 %v93
  %v190 = vpop.f32.mrf.mxu0
  %v191 = vadd.f32 0.0, %v190
  %v192 = vpop.f32.mrf.mxu0
  %v193 = vadd.f32 0.0, %v192
  %194 = vmatmul.bf16.gmra.mxu0 %v94
  %v195 = vpop.f32.mrf.mxu0
  %v196 = vadd.f32 0.0, %v195
  %v197 = vpop.f32.mrf.mxu0
  %v198 = vadd.f32 0.0, %v197
  %199 = vdwg.mxu0
  %v200 = vld [vmem:[%s0] sm:$0xf]
  %v201 = vld [vmem:[%s0 + $0x4] sm:$0xf]
  %v202 = vld [vmem:[%s0 + $0x8] sm:$0xf]
  %v203 = vld [vmem:[%s0 + $0xc] sm:$0xf]
  %v204 = vld [vmem:[%s0 + $0x10] sm:$0xf]
  %v205 = vld [vmem:[%s0 + $0x14] sm:$0xf]
  %v206 = vld [vmem:[%s0 + $0x18] sm:$0xf]
  %v207 = vld [vmem:[%s0 + $0x1c] sm:$0xf]
  %v208 = vld [vmem:[%s0 + $0x20] sm:$0xf]
  %v209 = vld [vmem:[%s0 + $0x24] sm:$0xf]
  %v210 = vld [vmem:[%s0 + $0x28] sm:$0xf]
  %v211 = vld [vmem:[%s0 + $0x2c] sm:$0xf]
  %v212 = vld [vmem:[%s0 + $0x30] sm:$0xf]
  %v213 = vld [vmem:[%s0 + $0x34] sm:$0xf]
  %v214 = vld [vmem:[%s0 + $0x38] sm:$0xf]
  %v215 = vld [vmem:[%s0 + $0x3c] sm:$0xf]
  %v216 = vpack.c.bf16 %v163, %v161
  %v217 = vpack.c.bf16 %v168, %v166
  %v218 = vpack.c.bf16 %v173, %v171
  %v219 = vpack.c.bf16 %v178, %v176
  %v220 = vpack.c.bf16 %v183, %v181
  %v221 = vpack.c.bf16 %v188, %v186
  %v222 = vpack.c.bf16 %v193, %v191
  %v223 = vpack.c.bf16 %v198, %v196
  %v224 = vld [vmem:[%s3] sm:$0x1]
  %v226 = vperm.slane %v224, 0
  %v244 = vunpack.c.l.b16 %v200
  %v245 = vunpack.c.l.b16 %v201
  %v246 = vunpack.c.l.b16 %v202
  %v247 = vunpack.c.l.b16 %v203
  %v248 = vunpack.c.l.b16 %v204
  %v249 = vunpack.c.l.b16 %v205
  %v250 = vunpack.c.l.b16 %v206
  %v251 = vunpack.c.l.b16 %v207
  %v252 = vunpack.c.l.b16 %v208
  %v253 = vunpack.c.l.b16 %v209
  %v254 = vunpack.c.l.b16 %v210
  %v255 = vunpack.c.l.b16 %v211
  %v256 = vunpack.c.l.b16 %v212
  %v257 = vunpack.c.l.b16 %v213
  %v258 = vunpack.c.l.b16 %v214
  %v259 = vunpack.c.l.b16 %v215
  %v260 = vpack.c.b16 %v245, %v244
  %v261 = vpack.c.b16 %v247, %v246
  %v262 = vpack.c.b16 %v249, %v248
  %v263 = vpack.c.b16 %v251, %v250
  %v264 = vpack.c.b16 %v253, %v252
  %v265 = vpack.c.b16 %v255, %v254
  %v266 = vpack.c.b16 %v257, %v256
  %v267 = vpack.c.b16 %v259, %v258
  %276 = vmatpush.bf16.msra.mxu0 %v223
  %277 = vmatpush.bf16.msra.mxu0 %v222
  %278 = vmatpush.bf16.msra.mxu0 %v221
  %279 = vmatpush.bf16.msra.mxu0 %v220
  %280 = vmatpush.bf16.msra.mxu0 %v219
  %281 = vmatpush.bf16.msra.mxu0 %v218
  %282 = vmatpush.bf16.msra.mxu0 %v217
  %283 = vmatpush.bf16.msra.mxu0 %v216
  %284 = vmatmul.bf16.gmra.mxu0 %v260
  %v285 = vpop.f32.mrf.mxu0
  %v286 = vadd.f32 %v226, %v285
  %v287 = vpop.f32.mrf.mxu0
  %v288 = vadd.f32 %v226, %v287
  %289 = vmatmul.bf16.gmra.mxu0 %v261
  %v290 = vpop.f32.mrf.mxu0
  %v291 = vadd.f32 %v226, %v290
  %v292 = vpop.f32.mrf.mxu0
  %v293 = vadd.f32 %v226, %v292
  %294 = vmatmul.bf16.gmra.mxu0 %v262
  %v295 = vpop.f32.mrf.mxu0
  %v296 = vadd.f32 %v226, %v295
  %v297 = vpop.f32.mrf.mxu0
  %v298 = vadd.f32 %v226, %v297
  %299 = vmatmul.bf16.gmra.mxu0 %v263
  %v300 = vpop.f32.mrf.mxu0
  %v301 = vadd.f32 %v226, %v300
  %v302 = vpop.f32.mrf.mxu0
  %v303 = vadd.f32 %v226, %v302
  %304 = vmatmul.bf16.gmra.mxu0 %v264
  %v305 = vpop.f32.mrf.mxu0
  %v306 = vadd.f32 %v226, %v305
  %v307 = vpop.f32.mrf.mxu0
  %v308 = vadd.f32 %v226, %v307
  %309 = vmatmul.bf16.gmra.mxu0 %v265
  %v310 = vpop.f32.mrf.mxu0
  %v311 = vadd.f32 %v226, %v310
  %v312 = vpop.f32.mrf.mxu0
  %v313 = vadd.f32 %v226, %v312
  %314 = vmatmul.bf16.gmra.mxu0 %v266
  %v315 = vpop.f32.mrf.mxu0
  %v316 = vadd.f32 %v226, %v315
  %v317 = vpop.f32.mrf.mxu0
  %v318 = vadd.f32 %v226, %v317
  %319 = vmatmul.bf16.gmra.mxu0 %v267
  %v320 = vpop.f32.mrf.mxu0
  %v321 = vadd.f32 %v226, %v320
  %v322 = vpop.f32.mrf.mxu0
  %v323 = vadd.f32 %v226, %v322
  %324 = vdwg.mxu0
  %v325 = vmax.f32 %v286, 0.0
  %v326 = vmax.f32 %v288, 0.0
  %v327 = vmax.f32 %v291, 0.0
  %v328 = vmax.f32 %v293, 0.0
  %v329 = vmax.f32 %v296, 0.0
  %v330 = vmax.f32 %v298, 0.0
  %v331 = vmax.f32 %v301, 0.0
  %v332 = vmax.f32 %v303, 0.0
  %v333 = vmax.f32 %v306, 0.0
  %v334 = vmax.f32 %v308, 0.0
  %v335 = vmax.f32 %v311, 0.0
  %v336 = vmax.f32 %v313, 0.0
  %v337 = vmax.f32 %v316, 0.0
  %v338 = vmax.f32 %v318, 0.0
  %v339 = vmax.f32 %v321, 0.0
  %v340 = vmax.f32 %v323, 0.0
  %v341 = vpack.c.bf16 %v326, %v325
  %v342 = vpack.c.bf16 %v328, %v327
  %v343 = vpack.c.bf16 %v330, %v329
  %v344 = vpack.c.bf16 %v332, %v331
  %v345 = vpack.c.bf16 %v334, %v333
  %v346 = vpack.c.bf16 %v336, %v335
  %v347 = vpack.c.bf16 %v338, %v337
  %v348 = vpack.c.bf16 %v340, %v339
  %v349 = vld [vmem:[%s4] sm:$0xf]
  %v350 = vld [vmem:[%s4 + $0x4] sm:$0xf]
  %v351 = vld [vmem:[%s4 + $0x8] sm:$0xf]
  %v352 = vld [vmem:[%s4 + $0xc] sm:$0xf]
  %v353 = vld [vmem:[%s4 + $0x10] sm:$0xf]
  %v354 = vld [vmem:[%s4 + $0x14] sm:$0xf]
  %v355 = vld [vmem:[%s4 + $0x18] sm:$0xf]
  %v356 = vld [vmem:[%s4 + $0x1c] sm:$0xf]
  %v357 = vld [vmem:[%s4 + $0x20] sm:$0xf]
  %v358 = vld [vmem:[%s4 + $0x24] sm:$0xf]
  %v359 = vld [vmem:[%s4 + $0x28] sm:$0xf]
  %v360 = vld [vmem:[%s4 + $0x2c] sm:$0xf]
  %v361 = vld [vmem:[%s4 + $0x30] sm:$0xf]
  %v362 = vld [vmem:[%s4 + $0x34] sm:$0xf]
  %v363 = vld [vmem:[%s4 + $0x38] sm:$0xf]
  %v364 = vld [vmem:[%s4 + $0x3c] sm:$0xf]
  %v381 = vunpack.c.l.b16 %v349
  %v382 = vunpack.c.l.b16 %v350
  %v383 = vunpack.c.l.b16 %v351
  %v384 = vunpack.c.l.b16 %v352
  %v385 = vunpack.c.l.b16 %v353
  %v386 = vunpack.c.l.b16 %v354
  %v387 = vunpack.c.l.b16 %v355
  %v388 = vunpack.c.l.b16 %v356
  %v389 = vunpack.c.l.b16 %v357
  %v390 = vunpack.c.l.b16 %v358
  %v391 = vunpack.c.l.b16 %v359
  %v392 = vunpack.c.l.b16 %v360
  %v393 = vunpack.c.l.b16 %v361
  %v394 = vunpack.c.l.b16 %v362
  %v395 = vunpack.c.l.b16 %v363
  %v396 = vunpack.c.l.b16 %v364
  %v397 = vpack.c.b16 %v382, %v381
  %v398 = vpack.c.b16 %v384, %v383
  %v399 = vpack.c.b16 %v386, %v385
  %v400 = vpack.c.b16 %v388, %v387
  %v401 = vpack.c.b16 %v390, %v389
  %v402 = vpack.c.b16 %v392, %v391
  %v403 = vpack.c.b16 %v394, %v393
  %v404 = vpack.c.b16 %v396, %v395
  %413 = vmatpush.bf16.msra.mxu0 %v404
  %414 = vmatpush.bf16.msra.mxu0 %v403
  %415 = vmatpush.bf16.msra.mxu0 %v402
  %416 = vmatpush.bf16.msra.mxu0 %v401
  %417 = vmatpush.bf16.msra.mxu0 %v400
  %418 = vmatpush.bf16.msra.mxu0 %v399
  %419 = vmatpush.bf16.msra.mxu0 %v398
  %420 = vmatpush.bf16.msra.mxu0 %v397
  %421 = vmatmul.bf16.gmra.mxu0 %v341
  %v422 = vpop.f32.mrf.mxu0
  %v423 = vadd.f32 0.0, %v422
  %v424 = vpop.f32.mrf.mxu0
  %v425 = vadd.f32 0.0, %v424
  %426 = vmatmul.bf16.gmra.mxu0 %v342
  %v427 = vpop.f32.mrf.mxu0
  %v428 = vadd.f32 0.0, %v427
  %v429 = vpop.f32.mrf.mxu0
  %v430 = vadd.f32 0.0, %v429
  %431 = vmatmul.bf16.gmra.mxu0 %v343
  %v432 = vpop.f32.mrf.mxu0
  %v433 = vadd.f32 0.0, %v432
  %v434 = vpop.f32.mrf.mxu0
  %v435 = vadd.f32 0.0, %v434
  %436 = vmatmul.bf16.gmra.mxu0 %v344
  %v437 = vpop.f32.mrf.mxu0
  %v438 = vadd.f32 0.0, %v437
  %v439 = vpop.f32.mrf.mxu0
  %v440 = vadd.f32 0.0, %v439
  %441 = vmatmul.bf16.gmra.mxu0 %v345
  %v442 = vpop.f32.mrf.mxu0
  %v443 = vadd.f32 0.0, %v442
  %v444 = vpop.f32.mrf.mxu0
  %v445 = vadd.f32 0.0, %v444
  %446 = vmatmul.bf16.gmra.mxu0 %v346
  %v447 = vpop.f32.mrf.mxu0
  %v448 = vadd.f32 0.0, %v447
  %v449 = vpop.f32.mrf.mxu0
  %v450 = vadd.f32 0.0, %v449
  %451 = vmatmul.bf16.gmra.mxu0 %v347
  %v452 = vpop.f32.mrf.mxu0
  %v453 = vadd.f32 0.0, %v452
  %v454 = vpop.f32.mrf.mxu0
  %v455 = vadd.f32 0.0, %v454
  %456 = vmatmul.bf16.gmra.mxu0 %v348
  %v457 = vpop.f32.mrf.mxu0
  %v458 = vadd.f32 0.0, %v457
  %v459 = vpop.f32.mrf.mxu0
  %v460 = vadd.f32 0.0, %v459
  %461 = vdwg.mxu0
  %v462 = vpack.c.bf16 %v425, %v423
  %v463 = vpack.c.bf16 %v430, %v428
  %v464 = vpack.c.bf16 %v435, %v433
  %v465 = vpack.c.bf16 %v440, %v438
  %v466 = vpack.c.bf16 %v445, %v443
  %v467 = vpack.c.bf16 %v450, %v448
  %v468 = vpack.c.bf16 %v455, %v453
  %v469 = vpack.c.bf16 %v460, %v458
  %v470 = vld [vmem:[%s5] sm:$0x1]
  %v472 = vperm.slane %v470, 0
  %474 = vmatpush.bf16.msra.mxu0 %v469
  %475 = vmatpush.bf16.msra.mxu0 %v468
  %476 = vmatpush.bf16.msra.mxu0 %v467
  %477 = vmatpush.bf16.msra.mxu0 %v466
  %478 = vmatpush.bf16.msra.mxu0 %v465
  %479 = vmatpush.bf16.msra.mxu0 %v464
  %480 = vmatpush.bf16.msra.mxu0 %v463
  %481 = vmatpush.bf16.msra.mxu0 %v462
  %482 = vmatmul.bf16.gmra.mxu0 %v260
  %v483 = vpop.f32.mrf.mxu0
  %v484 = vadd.f32 %v472, %v483
  %v485 = vpop.f32.mrf.mxu0
  %v486 = vadd.f32 %v472, %v485
  %487 = vmatmul.bf16.gmra.mxu0 %v261
  %v488 = vpop.f32.mrf.mxu0
  %v489 = vadd.f32 %v472, %v488
  %v490 = vpop.f32.mrf.mxu0
  %v491 = vadd.f32 %v472, %v490
  %492 = vmatmul.bf16.gmra.mxu0 %v262
  %v493 = vpop.f32.mrf.mxu0
  %v494 = vadd.f32 %v472, %v493
  %v495 = vpop.f32.mrf.mxu0
  %v496 = vadd.f32 %v472, %v495
  %497 = vmatmul.bf16.gmra.mxu0 %v263
  %v498 = vpop.f32.mrf.mxu0
  %v499 = vadd.f32 %v472, %v498
  %v500 = vpop.f32.mrf.mxu0
  %v501 = vadd.f32 %v472, %v500
  %502 = vmatmul.bf16.gmra.mxu0 %v264
  %v503 = vpop.f32.mrf.mxu0
  %v504 = vadd.f32 %v472, %v503
  %v505 = vpop.f32.mrf.mxu0
  %v506 = vadd.f32 %v472, %v505
  %507 = vmatmul.bf16.gmra.mxu0 %v265
  %v508 = vpop.f32.mrf.mxu0
  %v509 = vadd.f32 %v472, %v508
  %v510 = vpop.f32.mrf.mxu0
  %v511 = vadd.f32 %v472, %v510
  %512 = vmatmul.bf16.gmra.mxu0 %v266
  %v513 = vpop.f32.mrf.mxu0
  %v514 = vadd.f32 %v472, %v513
  %v515 = vpop.f32.mrf.mxu0
  %v516 = vadd.f32 %v472, %v515
  %517 = vmatmul.bf16.gmra.mxu0 %v267
  %v518 = vpop.f32.mrf.mxu0
  %v519 = vadd.f32 %v472, %v518
  %v520 = vpop.f32.mrf.mxu0
  %v521 = vadd.f32 %v472, %v520
  %522 = vdwg.mxu0
  %523 = vst [vmem:[%s6] sm:$0xff] %v484
  %524 = vst [vmem:[%s6 + $0x8] sm:$0xff] %v486
  %525 = vst [vmem:[%s6 + $0x10] sm:$0xff] %v489
  %526 = vst [vmem:[%s6 + $0x18] sm:$0xff] %v491
  %527 = vst [vmem:[%s6 + $0x20] sm:$0xff] %v494
  %528 = vst [vmem:[%s6 + $0x28] sm:$0xff] %v496
  %529 = vst [vmem:[%s6 + $0x30] sm:$0xff] %v499
  %530 = vst [vmem:[%s6 + $0x38] sm:$0xff] %v501
  %531 = vst [vmem:[%s6 + $0x40] sm:$0xff] %v504
  %532 = vst [vmem:[%s6 + $0x48] sm:$0xff] %v506
  %533 = vst [vmem:[%s6 + $0x50] sm:$0xff] %v509
  %534 = vst [vmem:[%s6 + $0x58] sm:$0xff] %v511
  %535 = vst [vmem:[%s6 + $0x60] sm:$0xff] %v514
  %536 = vst [vmem:[%s6 + $0x68] sm:$0xff] %v516
  %537 = vst [vmem:[%s6 + $0x70] sm:$0xff] %v519
  %538 = vst [vmem:[%s6 + $0x78] sm:$0xff] %v521
  // Predicated region
  $region26: #{gcn_forward.1} parent=0 // pred_check
    _
  $region27: #{gcn_forward.1} parent=0 // pred_check_branch
    %540 = sbr.rel (0) target = $region29
  $region28: #{gcn_forward.1} parent=0 // pred_region
    _
  $region29: #{gcn_forward.1} parent=0 // pred_fallthru
    _
  // Predicated region
  $region30: #{gcn_forward.1} parent=0 // pred_check
    _
  $region31: #{gcn_forward.1} parent=0 // pred_check_branch
    %542 = sbr.rel (0) target = $region33
  $region32: #{gcn_forward.1} parent=0 // pred_region
    _
  $region33: #{gcn_forward.1} parent=0 // pred_fallthru
    _

</llo_original>
